<compile_context>
chip_gen: v6e
topology: v6e:2x2x1
jax: 0.10.0
libtpu: 0.0.40
codegen_flags: <defaults>
</compile_context>

<pallas_src>
import jax
import jax.numpy as jnp
from jax.experimental import pallas as pl
from jax.experimental.pallas import tpu as pltpu


def _agg_kernel(pref_ref, c_ref, tw_ref, out_ref):
    # pref_ref: (TB, n_assign, dim_node)
    # c_ref   : (TB, dim_node)
    # tw_ref  : (TB, n_assign)   -- precomputed 1 / |t_pref - t_c|
    # out_ref : (TB, dim_node)
    pref = pref_ref[...]
    c = c_ref[...]

    # scores[b, j] = sum_d pref[b, j, d] * c[b, d]   (VPU mul + lane reduce)
    scores = jnp.sum(pref * c[:, None, :], axis=-1)            # (TB, n_assign)
    scores = scores + tw_ref[...]

    # softmax over the n_assign axis
    m = jnp.max(scores, axis=-1, keepdims=True)
    e = jnp.exp(scores - m)
    w = e * pl.reciprocal(jnp.sum(e, axis=-1, keepdims=True), approx=False)

    # u[b, d] = sum_j w[b, j] * pref[b, j, d]        (VPU mul + sublane reduce)
    u = jnp.sum(w[:, :, None] * pref, axis=1)                  # (TB, dim_node)
    out_ref[...] = u.astype(out_ref.dtype)


def _round_up(x, m):
    return (x + m - 1) // m * m


def aggregate_layer(pref, c, t_pref, t_c, *, batch_block=512):
    """Pallas implementation of AggregateLayer.forward.

    pref  : (B, n_assign, dim_node) f32
    c     : (B, 1, dim_node)        f32
    t_pref: (B, 1, n_assign)        f32
    t_c   : (B, 1)                  f32
    returns u: (B, 1, dim_node) f32  (keepdim=True, matching the torch code)
    """
    B, n_assign, dim_node = pref.shape

    # Glue (free / tiny XLA ops): 2D views and the fused time-preference term.
    # NOTE: like the torch code, this is +inf if t_pref == t_c for some entry.
    c2 = c.reshape(B, dim_node)
    tw = 1.0 / jnp.abs(t_pref.reshape(B, n_assign) - t_c.reshape(B, 1))

    # Batch tile: big enough to amortize per-step overhead, small enough that
    # double-buffered blocks (incl. pref's 4x lane padding) fit VMEM everywhere.
    if B <= batch_block:
        tb = B                                  # one block covers the full batch
    else:
        n_blocks_target = -(-B // batch_block)
        tb = _round_up(-(-B // n_blocks_target), 8)   # sublane-aligned partial tile
    b_pad = _round_up(B, tb)
    if b_pad != B:
        pad = b_pad - B
        pref = jnp.pad(pref, ((0, pad), (0, 0), (0, 0)))
        c2 = jnp.pad(c2, ((0, pad), (0, 0)))
        # pad tw with 1.0 (not 0) so padded rows stay finite (they are discarded).
        tw = jnp.pad(tw, ((0, pad), (0, 0)), constant_values=1.0)
    n_blocks = b_pad // tb

    grid_spec = pltpu.PrefetchScalarGridSpec(
        num_scalar_prefetch=0,
        grid=(n_blocks,),
        in_specs=[
            pl.BlockSpec((tb, n_assign, dim_node), lambda i: (i, 0, 0)),
            pl.BlockSpec((tb, dim_node), lambda i: (i, 0)),
            pl.BlockSpec((tb, n_assign), lambda i: (i, 0)),
        ],
        out_specs=pl.BlockSpec((tb, dim_node), lambda i: (i, 0)),
    )

    cost = pl.CostEstimate(
        flops=4 * B * n_assign * dim_node,
        transcendentals=B * n_assign,
        bytes_accessed=4 * B * (n_assign * dim_node + 2 * dim_node + n_assign),
    )

    out = pl.pallas_call(
        _agg_kernel,
        out_shape=jax.ShapeDtypeStruct((b_pad, dim_node), jnp.float32),
        grid_spec=grid_spec,
        compiler_params=pltpu.CompilerParams(
            dimension_semantics=("parallel",),
            vmem_limit_bytes=32 * 1024 * 1024,
        ),
        cost_estimate=cost,
    )(pref, c2, tw)

    return out[:B].reshape(B, 1, dim_node)


def aggregate_layer_ref(pref, c, t_pref, t_c):
    """Pure-JAX reference mirroring the torch forward."""
    scores = jnp.sum(pref * c, axis=-1, keepdims=True)            # (B, n_assign, 1)
    tw = 1.0 / jnp.abs(t_pref - t_c[:, :, None])                  # (B, 1, n_assign)
    scores = scores + jnp.transpose(tw, (0, 2, 1))                # (B, n_assign, 1)
    w = jax.nn.softmax(scores, axis=-2)
    return jnp.sum(w * pref, axis=-2, keepdims=True)              # (B, 1, dim_node)


def _make_inputs(key, B, n_assign, dim_node):
    k1, k2, k3, k4 = jax.random.split(key, 4)
    pref = jax.random.normal(k1, (B, n_assign, dim_node), dtype=jnp.float32)
    c = jax.random.normal(k2, (B, 1, dim_node), dtype=jnp.float32)
    t_pref = jax.random.uniform(k3, (B, 1, n_assign), dtype=jnp.float32,
                                minval=0.5, maxval=2.0)
    t_c = jax.random.uniform(k4, (B, 1), dtype=jnp.float32,
                             minval=2.5, maxval=4.0)  # keep |t_pref - t_c| > 0
    return pref, c, t_pref, t_c


if __name__ == "__main__":
    key = jax.random.PRNGKey(0)

    # Small demo shape (single-block path).
    B, n_assign, dim_node = 2, 8, 32
    pref, c, t_pref, t_c = _make_inputs(key, B, n_assign, dim_node)
    u = jax.block_until_ready(aggregate_layer(pref, c, t_pref, t_c))
    u_ref = aggregate_layer_ref(pref, c, t_pref, t_c)
    assert u.shape == (B, 1, dim_node)
    assert jnp.allclose(u, u_ref, atol=1e-5, rtol=1e-5), "mismatch vs reference"

    # Exercise the multi-block + batch-padding path with a still-small batch.
    B2 = 24
    pref2, c2_, t_pref2, t_c2 = _make_inputs(jax.random.PRNGKey(1),
                                             B2, n_assign, dim_node)
    u2 = jax.block_until_ready(
        aggregate_layer(pref2, c2_, t_pref2, t_c2, batch_block=16))
    u2_ref = aggregate_layer_ref(pref2, c2_, t_pref2, t_c2)
    assert u2.shape == (B2, 1, dim_node)
    assert jnp.allclose(u2, u2_ref, atol=1e-5, rtol=1e-5), "mismatch (multi-block)"

    print("KERNEL_OK")
</pallas_src>

<mosaic_0001>
module attributes {stable_mosaic.version = 11 : i64} {
  func.func @_agg_kernel(%arg0: i32, %arg1: memref<2x8x32xf32, #tpu.memory_space<vmem>>, %arg2: memref<2x32xf32, #tpu.memory_space<vmem>>, %arg3: memref<2x8xf32, #tpu.memory_space<vmem>>, %arg4: memref<2x32xf32, #tpu.memory_space<vmem>>) attributes {dimension_semantics = [#tpu.dimension_semantics<parallel>], iteration_bounds = array<i64: 1>, scalar_prefetch = 0 : i64, scratch_operands = 0 : i64, tpu.core_type = #tpu.core_type<tc>, window_params = [{transform_indices = @transform_0, window_bounds = array<i64: 2, 8, 32>}, {transform_indices = @transform_1, window_bounds = array<i64: 2, 32>}, {transform_indices = @transform_2, window_bounds = array<i64: 2, 8>}, {transform_indices = @transform_3, window_bounds = array<i64: 2, 32>}]} {
    %c0 = arith.constant 0 : index
    %c0_0 = arith.constant 0 : index
    %c0_1 = arith.constant 0 : index
    %0 = vector.load %arg1[%c0, %c0_0, %c0_1] : memref<2x8x32xf32, #tpu.memory_space<vmem>>, vector<2x8x32xf32>
    %c0_2 = arith.constant 0 : index
    %c0_3 = arith.constant 0 : index
    %1 = vector.load %arg2[%c0_2, %c0_3] : memref<2x32xf32, #tpu.memory_space<vmem>>, vector<2x32xf32>
    %2 = vector.shape_cast %1 : vector<2x32xf32> to vector<2x1x32xf32>
    %3 = vector.broadcast %2 : vector<2x1x32xf32> to vector<2x8x32xf32>
    %4 = arith.mulf %0, %3 : vector<2x8x32xf32>
    %cst = arith.constant dense<0.000000e+00> : vector<2x8xf32>
    %5 = vector.multi_reduction <add>, %4, %cst [2] : vector<2x8x32xf32> to vector<2x8xf32>
    %c0_4 = arith.constant 0 : index
    %c0_5 = arith.constant 0 : index
    %6 = vector.load %arg3[%c0_4, %c0_5] : memref<2x8xf32, #tpu.memory_space<vmem>>, vector<2x8xf32>
    %7 = arith.addf %5, %6 : vector<2x8xf32>
    %cst_6 = arith.constant dense<0xFF800000> : vector<2xf32>
    %8 = vector.multi_reduction <maximumf>, %7, %cst_6 [1] : vector<2x8xf32> to vector<2xf32>
    %9 = vector.shape_cast %8 : vector<2xf32> to vector<2x1xf32>
    %10 = vector.broadcast %9 : vector<2x1xf32> to vector<2x8xf32>
    %11 = arith.subf %7, %10 : vector<2x8xf32>
    %12 = math.exp %11 : vector<2x8xf32>
    %cst_7 = arith.constant dense<0.000000e+00> : vector<2xf32>
    %13 = vector.multi_reduction <add>, %12, %cst_7 [1] : vector<2x8xf32> to vector<2xf32>
    %14 = vector.shape_cast %13 : vector<2xf32> to vector<2x1xf32>
    %15 = tpu.reciprocal %14 : vector<2x1xf32> -> vector<2x1xf32>
    %16 = vector.broadcast %15 : vector<2x1xf32> to vector<2x8xf32>
    %17 = arith.mulf %12, %16 : vector<2x8xf32>
    %18 = vector.shape_cast %17 : vector<2x8xf32> to vector<2x8x1xf32>
    %19 = vector.broadcast %18 : vector<2x8x1xf32> to vector<2x8x32xf32>
    %20 = arith.mulf %19, %0 : vector<2x8x32xf32>
    %cst_8 = arith.constant dense<0.000000e+00> : vector<2x32xf32>
    %21 = vector.multi_reduction <add>, %20, %cst_8 [1] : vector<2x8x32xf32> to vector<2x32xf32>
    %c0_9 = arith.constant 0 : index
    %c0_10 = arith.constant 0 : index
    %22 = vector.load %arg4[%c0_9, %c0_10] : memref<2x32xf32, #tpu.memory_space<vmem>>, vector<2x32xf32>
    tpu.vector_store %arg4[%c0_9, %c0_10], %21 {strides = array<i32>} : memref<2x32xf32, #tpu.memory_space<vmem>>, vector<2x32xf32>,
    return
  }
  func.func @transform_0(%arg0: i32) -> (i32, i32, i32) {
    %c0_i32 = arith.constant 0 : i32
    %c0_i32_0 = arith.constant 0 : i32
    %c0_i32_1 = arith.constant 0 : i32
    return %arg0, %c0_i32, %c0_i32_0 : i32, i32, i32
  }
  func.func @transform_1(%arg0: i32) -> (i32, i32) {
    %c0_i32 = arith.constant 0 : i32
    %c0_i32_0 = arith.constant 0 : i32
    return %arg0, %c0_i32 : i32, i32
  }
  func.func @transform_2(%arg0: i32) -> (i32, i32) {
    %c0_i32 = arith.constant 0 : i32
    %c0_i32_0 = arith.constant 0 : i32
    return %arg0, %c0_i32 : i32, i32
  }
  func.func @transform_3(%arg0: i32) -> (i32, i32) {
    %c0_i32 = arith.constant 0 : i32
    %c0_i32_0 = arith.constant 0 : i32
    return %arg0, %c0_i32 : i32, i32
  }
}

</mosaic_0001>

<llo_original>
// kernel: tpu_custom_call.1
$region0: #{tpu_custom_call.1}
  #allocation0 [shape = 'u32[]', space=smem, size = 0x4, offset = 0x4, fixed_abs, tag = 'smem constant byte address 0x4 - core index']
  #allocation1 [shape = 'u32[144,128]{1,0:T(1,128)}', space=vmem, size = 0x12000, scoped, tag = 'internal scratch']
  %s0 = inlined_call_operand.hbm [shape: f32[2,8,32], index: 0, kind: input, shape index: {}]
  %s1 = inlined_call_operand.hbm [shape: f32[2,32], index: 1, kind: input, shape index: {}]
  %s2 = inlined_call_operand.vmem [shape: f32[2,8], index: 2, kind: input, shape index: {}]
  %s3 = inlined_call_operand.hbm [shape: f32[2,32], index: 3, kind: output, shape index: {}]
  %s4 = sld [smem:[#allocation0]]
  $region30: #{tpu_custom_call.1} parent=0
    _
  %s6 = ssub.s32 1, %s4
  %s7 = scalar_select 0, %s6, %s4
  $region1: #{tpu_custom_call.1} parent=0
    #allocation2 [shape = 'u8[8192]{0}', space=vmem, size = 0x2000, scoped, tag = 'input window, operand 0, single buffered']
    #allocation3 [shape = 's32[1]{0}', space=sflag, size = 0x4, scoped, tag = 'scoped memory for tpu_custom_call.1']
    #allocation4 [shape = 's32[1]{0}', space=sflag, size = 0x4, scoped, tag = 'scoped memory for tpu_custom_call.1']
    #allocation5 [shape = 'u8[1024]{0}', space=vmem, size = 0x400, scoped, tag = 'input window, operand 1, single buffered']
    #allocation6 [shape = 's32[1]{0}', space=sflag, size = 0x4, scoped, tag = 'scoped memory for tpu_custom_call.1']
    #allocation7 [shape = 'u8[1024]{0}', space=vmem, size = 0x400, scoped, tag = 'output window, operand 0, single buffered']
    %8 = vsyncpa [#allocation3], 0
    %9 = vsyncpa [#allocation6], 0
    %10 = vsyncpa [#allocation4], 0
    // Predicated region
    $region2: #{tpu_custom_call.1} parent=1 // pred_check
      _
    $region3: #{tpu_custom_call.1} parent=1 // pred_check_branch
      %12 = sbr.rel (0) target = $region5
    $region4: #{tpu_custom_call.1} parent=1 // pred_region
      %s14 = ssub.s32 256, 256
      %15 = vsyncadd [#allocation3], %s14
      %s16 = sshll.u32 [#allocation2], 4
      %s17 = int_to_ptr.vmem [resolvable:$true] %s16
      %22 = dma.hbm_to_vmem [thread:$0]  %s0, 256, %s17, [#allocation3], 128, 128, 8
    $region5: #{tpu_custom_call.1} parent=1 // pred_fallthru
      _
    // Predicated region
    $region6: #{tpu_custom_call.1} parent=1 // pred_check
      _
    $region7: #{tpu_custom_call.1} parent=1 // pred_check_branch
      %24 = sbr.rel (0) target = $region9
    $region8: #{tpu_custom_call.1} parent=1 // pred_region
      %s26 = ssub.s32 32, 32
      %27 = vsyncadd [#allocation6], %s26
      %s29 = sshll.u32 [#allocation5], 4
      %s30 = int_to_ptr.vmem [resolvable:$true] %s29
      %32 = dma.hbm_to_vmem [thread:$0]  %s1, 32, %s30, [#allocation6]
    $region9: #{tpu_custom_call.1} parent=1 // pred_fallthru
      _
    // Predicated region
    $region10: #{tpu_custom_call.1} parent=1 // pred_check
      _
    $region11: #{tpu_custom_call.1} parent=1 // pred_check_branch
      %34 = sbr.rel (0) target = $region13
    $region12: #{tpu_custom_call.1} parent=1 // pred_region
      _
    $region13: #{tpu_custom_call.1} parent=1 // pred_fallthru
      _
    // Predicated region
    $region14: #{tpu_custom_call.1} parent=1 // pred_check
      _
    $region15: #{tpu_custom_call.1} parent=1 // pred_check_branch
      %36 = sbr.rel (0) target = $region17
    $region16: #{tpu_custom_call.1} parent=1 // pred_region
      %37 = dma.done [#allocation3], 256
    $region17: #{tpu_custom_call.1} parent=1 // pred_fallthru
      _
    // Predicated region
    $region18: #{tpu_custom_call.1} parent=1 // pred_check
      _
    $region19: #{tpu_custom_call.1} parent=1 // pred_check_branch
      %39 = sbr.rel (0) target = $region21
    $region20: #{tpu_custom_call.1} parent=1 // pred_region
      %40 = dma.done [#allocation6], 32
    $region21: #{tpu_custom_call.1} parent=1 // pred_fallthru
      _
    %v41 = vld [vmem:[#allocation2] sm:$0xff]
    %v42 = vld [vmem:[#allocation2 + $0x8] sm:$0xff]
    %v43 = vld [vmem:[#allocation5] sm:$0x3]
    %v46 = vunpack.c.l.s4 1966171168
    %v47 = vunpack.c.0.s8 %v46
    %v48 = vlaneseq
    %v49 = vshrl.u32 %v48, 7
    %v50 = vsub.s32 %v47, %v49
    %v51 = vrot.slane %v43, %v50
    %v52 = vcombine.high %v51, %v51
    %v54 = vunpack.c.l.s4 1966171168
    %v55 = vunpack.c.0.s8 %v54
    %v56 = vlaneseq
    %v57 = vshrl.u32 %v56, 7
    %v58 = vsub.s32 %v55, %v57
    %v59 = vrot.slane %v51, %v58
    %v61 = vunpack.c.l.s4 1966171168
    %v62 = vunpack.c.0.s8 %v61
    %v63 = vlaneseq
    %v64 = vshrl.u32 %v63, 7
    %v65 = vsub.s32 %v62, %v64
    %v66 = vrot.slane %v52, %v65
    %v67 = vlaneseq
    %v68 = vshrl.u32 %v67, 7
    %v69 = vsub.s32 0, %v68
    %v70 = vrot.slane %v59, %v69
    %v71 = vlaneseq
    %v72 = vshrl.u32 %v71, 7
    %v73 = vsub.s32 0, %v72
    %v74 = vrot.slane %v66, %v73
    %v77 = vmul.f32 %v41, %v70
    %v78 = vmul.f32 %v42, %v74
    %vm79 = vcmask 261120
    %v80 = vsel %vm79, %v77, 0.0
    %81 = vadd.xlane.f32.xlu0 %v80
    %v82 = vpop.xlane.xlu0 %81
    %v83 = vsel %vm79, %v78, 0.0
    %84 = vadd.xlane.f32.xlu0 %v83
    %v85 = vpop.xlane.xlu0 %84
    %v86 = vld [vmem:[%s2] sm:$0x3]
    %v88 = vlaneseq
    %v89 = vshrl.u32 %v88, 7
    %v90 = vsub.s32 0, %v89
    %v91 = vrot.slane %v86, %v90
    %93 = vbcast.lane.b32.xlu0 %v91, 256
    %v94 = vpop.permute.xlu0 %93
    %v95 = vlaneseq
    %v96 = vshrl.u32 %v95, 7
    %v97 = vsub.s32 1, %v96
    %v98 = vrot.slane %v86, %v97
    %100 = vbcast.lane.b32.xlu0 %v98, 256
    %v101 = vpop.permute.xlu0 %100
    %v104 = vadd.f32 %v82, %v94
    %v105 = vadd.f32 %v85, %v101
    %108 = vset.pattern.permute.xlu0 0
    %109 = vperm.xlu0 %108, %v104
    %v110 = vpop.permute.xlu0 %109
    %111 = vset.pattern.permute.xlu0 0
    %112 = vperm.xlu0 %111, %v105
    %v113 = vpop.permute.xlu0 %112
    %v114 = vlaneseq
    %v115 = vand.u32 %v114, 127
    %v116 = vlaneseq
    %v117 = vshrl.u32 %v116, 7
    %v118 = vsub.s32 %v115, %v117
    %v119 = vrot.slane %v110, %v118
    %v120 = vlaneseq
    %v121 = vshrl.u32 %v120, 7
    %v122 = vsub.s32 %v115, %v121
    %v123 = vrot.slane %v113, %v122
    %vm124 = vcmask 1041409
    %v125 = vsel %vm124, %v123, %v119
    %vm127 = vcmask 58368
    %v128 = vsel %vm127, %v125, -inf
    %129 = vmax.xlane.f32.xlu0 %v128
    %v130 = vpop.xlane.xlu0 %129
    %v132 = vlaneseq
    %v133 = vshrl.u32 %v132, 7
    %v134 = vsub.s32 0, %v133
    %v135 = vrot.slane %v130, %v134
    %v136 = vlaneseq
    %v137 = vshrl.u32 %v136, 7
    %v138 = vsub.s32 1, %v137
    %v139 = vrot.slane %v130, %v138
    %v142 = vsub.f32 %v104, %v135
    %v143 = vsub.f32 %v105, %v139
    %v144 = vmul.f32 %v142, 1.442695
    %v145 = vpow.pop %v144
    %v146 = vmul.f32 %v143, 1.442695
    %v147 = vpow.pop %v146
    %150 = vset.pattern.permute.xlu0 0
    %151 = vperm.xlu0 %150, %v145
    %v152 = vpop.permute.xlu0 %151
    %153 = vset.pattern.permute.xlu0 0
    %154 = vperm.xlu0 %153, %v147
    %v155 = vpop.permute.xlu0 %154
    %v156 = vlaneseq
    %v157 = vshrl.u32 %v156, 7
    %v158 = vsub.s32 %v115, %v157
    %v159 = vrot.slane %v152, %v158
    %v160 = vlaneseq
    %v161 = vshrl.u32 %v160, 7
    %v162 = vsub.s32 %v115, %v161
    %v163 = vrot.slane %v155, %v162
    %v164 = vsel %vm124, %v163, %v159
    %v166 = vsel %vm127, %v164, 0.0
    %167 = vadd.xlane.f32.xlu0 %v166
    %v168 = vpop.xlane.xlu0 %167
    %v169 = vrcp.pop %v168
    %v171 = vlaneseq
    %v172 = vshrl.u32 %v171, 7
    %v173 = vsub.s32 0, %v172
    %v174 = vrot.slane %v169, %v173
    %v175 = vlaneseq
    %v176 = vshrl.u32 %v175, 7
    %v177 = vsub.s32 1, %v176
    %v178 = vrot.slane %v169, %v177
    %v181 = vmul.f32 %v145, %v174
    %v182 = vmul.f32 %v147, %v178
    %184 = vset.pattern.permute.xlu0 0
    %185 = vperm.xlu0 %184, %v181
    %v186 = vpop.permute.xlu0 %185
    %189 = vset.pattern.permute.xlu0 0
    %190 = vperm.xlu0 %189, %v182
    %v191 = vpop.permute.xlu0 %190
    %v193 = vmul.f32 %v186, %v41
    %v194 = vmul.f32 %v191, %v42
    %v195 = vsel %vm79, %v193, 0.0
    %v196 = vrot.slane %v195, 4
    %v197 = vadd.f32 %v195, %v196
    %v198 = vrot.slane %v197, 2
    %v199 = vadd.f32 %v197, %v198
    %v200 = vrot.slane %v199, 1
    %v201 = vadd.f32 %v199, %v200
    %v202 = vsel %vm79, %v194, 0.0
    %v203 = vrot.slane %v202, 4
    %v204 = vadd.f32 %v202, %v203
    %v205 = vrot.slane %v204, 2
    %v206 = vadd.f32 %v204, %v205
    %v207 = vrot.slane %v206, 1
    %v208 = vadd.f32 %v206, %v207
    %v211 = vsel %vm124, %v208, %v201
    %vm213 = vcmask 254976
    %214 = vst.msk [vmem:[#allocation7] sm:$0x3] %vm213, %v211
    // Predicated region
    $region22: #{tpu_custom_call.1} parent=1 // pred_check
      _
    $region23: #{tpu_custom_call.1} parent=1 // pred_check_branch
      %216 = sbr.rel (0) target = $region25
    $region24: #{tpu_custom_call.1} parent=1 // pred_region
      %s218 = ssub.s32 32, 32
      %219 = vsyncadd [#allocation4], %s218
      %s221 = sshll.u32 [#allocation7], 4
      %s222 = int_to_ptr.vmem [resolvable:$true] %s221
      %224 = dma.vmem_to_hbm [thread:$0]  %s222, 32, %s3, [#allocation4]
    $region25: #{tpu_custom_call.1} parent=1 // pred_fallthru
      _
    // Predicated region
    $region26: #{tpu_custom_call.1} parent=1 // pred_check
      _
    $region27: #{tpu_custom_call.1} parent=1 // pred_check_branch
      %226 = sbr.rel (0) target = $region29
    $region28: #{tpu_custom_call.1} parent=1 // pred_region
      %227 = dma.done [#allocation4], 32
    $region29: #{tpu_custom_call.1} parent=1 // pred_fallthru
      _
    %228 = vsyncpa [#allocation3], 1
    %229 = vsyncpa [#allocation6], 1
    %230 = vsyncpa [#allocation4], 1

</llo_original>
